<compile_context>
chip_gen: v6e
topology: v6e:2x2x1
jax: 0.10.0
libtpu: 0.0.40
codegen_flags: <defaults>
</compile_context>

<pallas_src>
import jax
import jax.numpy as jnp
from jax.experimental import pallas as pl
from jax.experimental.pallas import tpu as pltpu

_LANE = 128                        # lane width (last vreg dim)
_SUBLANE = 8                       # sublane width (second-to-last vreg dim)
_ROWS_TARGET = 256                 # LHS rows per linear matmul (v6e/v7x MXU)
_VMEM_BUDGET = 24 * 1024 * 1024    # per-step residency target (fits v7x 64 MiB)
_VMEM_LIMIT = 48 * 1024 * 1024     # raised scoped VMEM limit


def _round_up(n, m):
    return ((n + m - 1) // m) * m


def _step_vmem_bytes(bb, t, s, d):
    """Rough per-grid-step VMEM residency (f32)."""
    blocks = bb * t * d + bb * s * d + 3 * d * d + 2 * d + bb * t * d + bb * t * s
    temps = 3 * bb * t * s + 3 * bb * t * d     # score/e/align + h/context/out
    return 4 * (2 * blocks + temps)             # pipelined blocks double-buffered


def _choose_bb(B, T, S, D):
    bb = max(1, min(B, -(-_ROWS_TARGET // T)))  # ceil(rows_target / T), capped at B
    if B >= 2:                                  # keep >= 2 grid steps: megacore /
        bb = min(bb, -(-B // 2))                # v7x 2-TC sharding of the batch axis
    while bb > 1 and _step_vmem_bytes(bb, T, S, D) > _VMEM_BUDGET:
        bb -= 1
    return bb


def _attention_kernel(x_ref, mem_ref, w_in_t_ref, b_in_ref,
                      w_out_c_t_ref, w_out_x_t_ref, b_out_ref,
                      attn_ref, align_ref):
    Bb, T, D = x_ref.shape

    x3 = x_ref[...]                     # (Bb, T, D)
    mem = mem_ref[...]                  # (Bb, S, D)

    # ---- linear_in on all Bb*T rows at once.  T is a multiple of 8, so the
    # (Bb, T, D) <-> (Bb*T, D) reshapes are pure sublane-tile relabelings. ----
    x2 = x3.reshape(Bb * T, D)
    h2 = jnp.dot(x2, w_in_t_ref[...], preferred_element_type=jnp.float32)
    h2 = h2 + b_in_ref[...]
    h3 = h2.reshape(Bb, T, D)

    # ---- score = h_t @ mem^T: batched contraction over the feature dim
    # (contraction on both minor dims; no explicit mem transpose is built). ----
    score = jnp.einsum('btd,bsd->bts', h3, mem,
                       preferred_element_type=jnp.float32)        # (Bb, T, S)

    # ---- numerically stable softmax over S (no padded columns, no mask) ----
    m = jnp.max(score, axis=-1, keepdims=True)
    e = jnp.exp(score - m)
    denom = jnp.sum(e, axis=-1, keepdims=True)
    align = e * pl.reciprocal(denom, approx=False)                # (Bb, T, S)

    # ---- context = align @ mem ----
    context = jnp.einsum('bts,bsd->btd', align, mem,
                         preferred_element_type=jnp.float32)      # (Bb, T, D)

    # ---- linear_out on cat([context, x], -1) as two K=D matmuls
    # (avoids an unaligned lane-dim concatenate; equivalent math) ----
    c2 = context.reshape(Bb * T, D)
    out = jnp.dot(c2, w_out_c_t_ref[...], preferred_element_type=jnp.float32)
    out = out + jnp.dot(x2, w_out_x_t_ref[...], preferred_element_type=jnp.float32)
    out = out + b_out_ref[...]

    attn_ref[...] = jnp.tanh(out).reshape(Bb, T, D).astype(attn_ref.dtype)
    align_ref[...] = align.astype(align_ref.dtype)


@jax.jit
def attention_forward(x, memory_bank, w_in, b_in, w_out, b_out):
    """x: (B, T, D); memory_bank: (B, S, D).
    w_in: (D, D) PyTorch layout (out, in); w_out: (D, 2D); biases (D,)."""
    B, T, D = x.shape
    _, S, _ = memory_bank.shape
    f32 = jnp.float32

    # Only pad what must be padded; S is never padded.
    Dp = _round_up(D, _LANE) if D % _LANE else D          # lane-dense features
    Tp = _round_up(T, _SUBLANE) if T % _SUBLANE else T    # free in-kernel reshape

    Bb = _choose_bb(B, Tp, S, Dp)
    nb = -(-B // Bb)                                      # cdiv grid over batch
    Bp = nb * Bb

    # ---- guarded pads (all skipped when shapes are already aligned) ----
    xp = x.astype(f32)
    if (Bp, Tp, Dp) != (B, T, D):
        xp = jnp.zeros((Bp, Tp, Dp), f32).at[:B, :T, :D].set(xp)
    memp = memory_bank.astype(f32)
    if (Bp, Dp) != (B, D):
        memp = jnp.zeros((Bp, S, Dp), f32).at[:B, :, :D].set(memp)

    w_in_t = w_in.T.astype(f32)
    w_out_c_t = w_out[:, :D].T.astype(f32)
    w_out_x_t = w_out[:, D:].T.astype(f32)
    if Dp != D:
        w_in_t = jnp.zeros((Dp, Dp), f32).at[:D, :D].set(w_in_t)
        w_out_c_t = jnp.zeros((Dp, Dp), f32).at[:D, :D].set(w_out_c_t)
        w_out_x_t = jnp.zeros((Dp, Dp), f32).at[:D, :D].set(w_out_x_t)
    if Dp == D:
        b_in_p = b_in.astype(f32).reshape(1, D)
        b_out_p = b_out.astype(f32).reshape(1, D)
    else:
        b_in_p = jnp.zeros((1, Dp), f32).at[0, :D].set(b_in.astype(f32))
        b_out_p = jnp.zeros((1, Dp), f32).at[0, :D].set(b_out.astype(f32))

    attn_p, align_p = pl.pallas_call(
        _attention_kernel,
        out_shape=(
            jax.ShapeDtypeStruct((Bp, Tp, Dp), f32),
            jax.ShapeDtypeStruct((Bp, Tp, S), f32),
        ),
        grid_spec=pltpu.PrefetchScalarGridSpec(
            num_scalar_prefetch=0,
            grid=(nb,),
            in_specs=[
                pl.BlockSpec((Bb, Tp, Dp), lambda i: (i, 0, 0)),  # x
                pl.BlockSpec((Bb, S, Dp), lambda i: (i, 0, 0)),   # memory_bank (full S)
                pl.BlockSpec((Dp, Dp), lambda i: (0, 0)),         # W_in^T
                pl.BlockSpec((1, Dp), lambda i: (0, 0)),          # b_in
                pl.BlockSpec((Dp, Dp), lambda i: (0, 0)),         # W_out_c^T
                pl.BlockSpec((Dp, Dp), lambda i: (0, 0)),         # W_out_x^T
                pl.BlockSpec((1, Dp), lambda i: (0, 0)),          # b_out
            ],
            out_specs=[
                pl.BlockSpec((Bb, Tp, Dp), lambda i: (i, 0, 0)),  # attn_h
                pl.BlockSpec((Bb, Tp, S), lambda i: (i, 0, 0)),   # align (unpadded S)
            ],
        ),
        compiler_params=pltpu.CompilerParams(
            dimension_semantics=("parallel",),
            vmem_limit_bytes=_VMEM_LIMIT),
    )(xp, memp, w_in_t, b_in_p, w_out_c_t, w_out_x_t, b_out_p)

    # ---- guarded slices (no-ops when nothing was padded) ----
    attn = attn_p if (Bp, Tp, Dp) == (B, T, D) else attn_p[:B, :T, :D]
    align = align_p if (Bp, Tp) == (B, T) else align_p[:B, :T, :]
    return attn, align


def _reference(x, mem, w_in, b_in, w_out, b_out):
    h_t = jnp.einsum('btd,ed->bte', x, w_in) + b_in
    score = jnp.einsum('btd,bsd->bts', h_t, mem)
    align = jax.nn.softmax(score, axis=-1)
    context = jnp.einsum('bts,bsd->btd', align, mem)
    concat = jnp.concatenate([context, x], axis=-1)
    attn = jnp.tanh(jnp.einsum('btc,dc->btd', concat, w_out) + b_out)
    return attn, align


if __name__ == "__main__":
    B, T, S, D = 2, 8, 8, 32

    key = jax.random.PRNGKey(0)
    k_x, k_m, k_wi, k_bi, k_wo, k_bo = jax.random.split(key, 6)

    x = jax.random.normal(k_x, (B, T, D), dtype=jnp.float32)
    memory_bank = jax.random.normal(k_m, (B, S, D), dtype=jnp.float32)

    # Parameter init mirroring the module's __init__:
    # linear_in.weight (D, D) ~ U(-0.1, 0.1); linear_out.weight (D, 2D) ~ U(-0.1, 0.1)
    w_in = jax.random.uniform(k_wi, (D, D), minval=-0.1, maxval=0.1, dtype=jnp.float32)
    w_out = jax.random.uniform(k_wo, (D, 2 * D), minval=-0.1, maxval=0.1, dtype=jnp.float32)
    # biases: PyTorch default U(-1/sqrt(fan_in), 1/sqrt(fan_in))
    b_in = jax.random.uniform(k_bi, (D,), minval=-1.0 / (D ** 0.5),
                              maxval=1.0 / (D ** 0.5), dtype=jnp.float32)
    b_out = jax.random.uniform(k_bo, (D,), minval=-1.0 / ((2 * D) ** 0.5),
                               maxval=1.0 / ((2 * D) ** 0.5), dtype=jnp.float32)

    attn_h, align = attention_forward(x, memory_bank, w_in, b_in, w_out, b_out)
    jax.block_until_ready((attn_h, align))

    ref_attn, ref_align = _reference(x, memory_bank, w_in, b_in, w_out, b_out)
    assert attn_h.shape == (B, T, D) and align.shape == (B, T, S)
    assert jnp.allclose(attn_h, ref_attn, rtol=1e-5, atol=1e-5)
    assert jnp.allclose(align, ref_align, rtol=1e-5, atol=1e-5)

    print("KERNEL_OK")
</pallas_src>

<mosaic_0001>
module attributes {stable_mosaic.version = 11 : i64} {
  func.func @_attention_kernel(%arg0: i32, %arg1: memref<1x8x128xf32, #tpu.memory_space<vmem>>, %arg2: memref<1x8x128xf32, #tpu.memory_space<vmem>>, %arg3: memref<128x128xf32, #tpu.memory_space<vmem>>, %arg4: memref<1x128xf32, #tpu.memory_space<vmem>>, %arg5: memref<128x128xf32, #tpu.memory_space<vmem>>, %arg6: memref<128x128xf32, #tpu.memory_space<vmem>>, %arg7: memref<1x128xf32, #tpu.memory_space<vmem>>, %arg8: memref<1x8x128xf32, #tpu.memory_space<vmem>>, %arg9: memref<1x8x8xf32, #tpu.memory_space<vmem>>) attributes {dimension_semantics = [#tpu.dimension_semantics<parallel>], iteration_bounds = array<i64: 2>, scalar_prefetch = 0 : i64, scratch_operands = 0 : i64, tpu.core_type = #tpu.core_type<tc>, window_params = [{transform_indices = @transform_0, window_bounds = array<i64: 1, 8, 128>}, {transform_indices = @transform_1, window_bounds = array<i64: 1, 8, 128>}, {pipeline_mode = #tpu.pipeline_mode<synchronous>, transform_indices = @transform_2, window_bounds = array<i64: 128, 128>}, {pipeline_mode = #tpu.pipeline_mode<synchronous>, transform_indices = @transform_3, window_bounds = array<i64: 1, 128>}, {pipeline_mode = #tpu.pipeline_mode<synchronous>, transform_indices = @transform_4, window_bounds = array<i64: 128, 128>}, {pipeline_mode = #tpu.pipeline_mode<synchronous>, transform_indices = @transform_5, window_bounds = array<i64: 128, 128>}, {pipeline_mode = #tpu.pipeline_mode<synchronous>, transform_indices = @transform_6, window_bounds = array<i64: 1, 128>}, {transform_indices = @transform_7, window_bounds = array<i64: 1, 8, 128>}, {transform_indices = @transform_8, window_bounds = array<i64: 1, 8, 8>}]} {
    %c0 = arith.constant 0 : index
    %c0_0 = arith.constant 0 : index
    %c0_1 = arith.constant 0 : index
    %0 = vector.load %arg1[%c0, %c0_0, %c0_1] : memref<1x8x128xf32, #tpu.memory_space<vmem>>, vector<1x8x128xf32>
    %c0_2 = arith.constant 0 : index
    %c0_3 = arith.constant 0 : index
    %c0_4 = arith.constant 0 : index
    %1 = vector.load %arg2[%c0_2, %c0_3, %c0_4] : memref<1x8x128xf32, #tpu.memory_space<vmem>>, vector<1x8x128xf32>
    %2 = vector.shape_cast %0 : vector<1x8x128xf32> to vector<8x128xf32>
    %c0_5 = arith.constant 0 : index
    %c0_6 = arith.constant 0 : index
    %3 = vector.load %arg3[%c0_5, %c0_6] : memref<128x128xf32, #tpu.memory_space<vmem>>, vector<128x128xf32>
    %cst = arith.constant dense<0.000000e+00> : vector<8x128xf32>
    %4 = tpu.matmul %2, %3, %cst {dimension_numbers = #tpu.dot_dimension_numbers<[1], [0], [0], [1], [0, 0, 1, 1], [], []>} : vector<8x128xf32>, vector<128x128xf32>, vector<8x128xf32> -> vector<8x128xf32>
    %c0_7 = arith.constant 0 : index
    %c0_8 = arith.constant 0 : index
    %5 = vector.load %arg4[%c0_7, %c0_8] : memref<1x128xf32, #tpu.memory_space<vmem>>, vector<1x128xf32>
    %6 = vector.broadcast %5 : vector<1x128xf32> to vector<8x128xf32>
    %7 = arith.addf %4, %6 : vector<8x128xf32>
    %8 = vector.shape_cast %7 : vector<8x128xf32> to vector<1x8x128xf32>
    "tpu.trace_start"() <{level = 10 : i32, message = "btd,bsd->bts"}> : () -> ()
    %cst_9 = arith.constant dense<0.000000e+00> : vector<1x8x8xf32>
    %9 = tpu.matmul %8, %1, %cst_9 {dimension_numbers = #tpu.dot_dimension_numbers<[2], [2], [1], [1], [0, 0, 0, 1, 1, 1], [0], [0]>} : vector<1x8x128xf32>, vector<1x8x128xf32>, vector<1x8x8xf32> -> vector<1x8x8xf32>
    "tpu.trace_stop"() : () -> ()
    %cst_10 = arith.constant dense<0xFF800000> : vector<1x8xf32>
    %10 = vector.multi_reduction <maximumf>, %9, %cst_10 [2] : vector<1x8x8xf32> to vector<1x8xf32>
    %11 = vector.shape_cast %10 : vector<1x8xf32> to vector<1x8x1xf32>
    %12 = vector.broadcast %11 : vector<1x8x1xf32> to vector<1x8x8xf32>
    %13 = arith.subf %9, %12 : vector<1x8x8xf32>
    %14 = math.exp %13 : vector<1x8x8xf32>
    %cst_11 = arith.constant dense<0.000000e+00> : vector<1x8xf32>
    %15 = vector.multi_reduction <add>, %14, %cst_11 [2] : vector<1x8x8xf32> to vector<1x8xf32>
    %16 = vector.shape_cast %15 : vector<1x8xf32> to vector<1x8x1xf32>
    %17 = tpu.reciprocal %16 : vector<1x8x1xf32> -> vector<1x8x1xf32>
    %18 = vector.broadcast %17 : vector<1x8x1xf32> to vector<1x8x8xf32>
    %19 = arith.mulf %14, %18 : vector<1x8x8xf32>
    "tpu.trace_start"() <{level = 10 : i32, message = "bts,bsd->btd"}> : () -> ()
    %cst_12 = arith.constant dense<0.000000e+00> : vector<1x8x128xf32>
    %20 = tpu.matmul %19, %1, %cst_12 {dimension_numbers = #tpu.dot_dimension_numbers<[2], [1], [1], [2], [0, 0, 0, 1, 1, 2], [0], [0]>} : vector<1x8x8xf32>, vector<1x8x128xf32>, vector<1x8x128xf32> -> vector<1x8x128xf32>
    "tpu.trace_stop"() : () -> ()
    %21 = vector.shape_cast %20 : vector<1x8x128xf32> to vector<8x128xf32>
    %c0_13 = arith.constant 0 : index
    %c0_14 = arith.constant 0 : index
    %22 = vector.load %arg5[%c0_13, %c0_14] : memref<128x128xf32, #tpu.memory_space<vmem>>, vector<128x128xf32>
    %cst_15 = arith.constant dense<0.000000e+00> : vector<8x128xf32>
    %23 = tpu.matmul %21, %22, %cst_15 {dimension_numbers = #tpu.dot_dimension_numbers<[1], [0], [0], [1], [0, 0, 1, 1], [], []>} : vector<8x128xf32>, vector<128x128xf32>, vector<8x128xf32> -> vector<8x128xf32>
    %c0_16 = arith.constant 0 : index
    %c0_17 = arith.constant 0 : index
    %24 = vector.load %arg6[%c0_16, %c0_17] : memref<128x128xf32, #tpu.memory_space<vmem>>, vector<128x128xf32>
    %cst_18 = arith.constant dense<0.000000e+00> : vector<8x128xf32>
    %25 = tpu.matmul %2, %24, %cst_18 {dimension_numbers = #tpu.dot_dimension_numbers<[1], [0], [0], [1], [0, 0, 1, 1], [], []>} : vector<8x128xf32>, vector<128x128xf32>, vector<8x128xf32> -> vector<8x128xf32>
    %26 = arith.addf %23, %25 : vector<8x128xf32>
    %c0_19 = arith.constant 0 : index
    %c0_20 = arith.constant 0 : index
    %27 = vector.load %arg7[%c0_19, %c0_20] : memref<1x128xf32, #tpu.memory_space<vmem>>, vector<1x128xf32>
    %28 = vector.broadcast %27 : vector<1x128xf32> to vector<8x128xf32>
    %29 = arith.addf %26, %28 : vector<8x128xf32>
    %30 = math.tanh %29 : vector<8x128xf32>
    %31 = vector.shape_cast %30 : vector<8x128xf32> to vector<1x8x128xf32>
    %c0_21 = arith.constant 0 : index
    %c0_22 = arith.constant 0 : index
    %c0_23 = arith.constant 0 : index
    %32 = vector.load %arg8[%c0_21, %c0_22, %c0_23] : memref<1x8x128xf32, #tpu.memory_space<vmem>>, vector<1x8x128xf32>
    tpu.vector_store %arg8[%c0_21, %c0_22, %c0_23], %31 {strides = array<i32>} : memref<1x8x128xf32, #tpu.memory_space<vmem>>, vector<1x8x128xf32>,
    %c0_24 = arith.constant 0 : index
    %c0_25 = arith.constant 0 : index
    %c0_26 = arith.constant 0 : index
    %33 = vector.load %arg9[%c0_24, %c0_25, %c0_26] : memref<1x8x8xf32, #tpu.memory_space<vmem>>, vector<1x8x8xf32>
    tpu.vector_store %arg9[%c0_24, %c0_25, %c0_26], %19 {strides = array<i32>} : memref<1x8x8xf32, #tpu.memory_space<vmem>>, vector<1x8x8xf32>,
    return
  }
  func.func @transform_0(%arg0: i32) -> (i32, i32, i32) {
    %c0_i32 = arith.constant 0 : i32
    %c0_i32_0 = arith.constant 0 : i32
    %c0_i32_1 = arith.constant 0 : i32
    return %arg0, %c0_i32, %c0_i32_0 : i32, i32, i32
  }
  func.func @transform_1(%arg0: i32) -> (i32, i32, i32) {
    %c0_i32 = arith.constant 0 : i32
    %c0_i32_0 = arith.constant 0 : i32
    %c0_i32_1 = arith.constant 0 : i32
    return %arg0, %c0_i32, %c0_i32_0 : i32, i32, i32
  }
  func.func @transform_2(%arg0: i32) -> (i32, i32) {
    %c0_i32 = arith.constant 0 : i32
    %c0_i32_0 = arith.constant 0 : i32
    %c0_i32_1 = arith.constant 0 : i32
    return %c0_i32, %c0_i32_0 : i32, i32
  }
  func.func @transform_3(%arg0: i32) -> (i32, i32) {
    %c0_i32 = arith.constant 0 : i32
    %c0_i32_0 = arith.constant 0 : i32
    %c0_i32_1 = arith.constant 0 : i32
    return %c0_i32, %c0_i32_0 : i32, i32
  }
  func.func @transform_4(%arg0: i32) -> (i32, i32) {
    %c0_i32 = arith.constant 0 : i32
    %c0_i32_0 = arith.constant 0 : i32
    %c0_i32_1 = arith.constant 0 : i32
    return %c0_i32, %c0_i32_0 : i32, i32
  }
  func.func @transform_5(%arg0: i32) -> (i32, i32) {
    %c0_i32 = arith.constant 0 : i32
    %c0_i32_0 = arith.constant 0 : i32
    %c0_i32_1 = arith.constant 0 : i32
    return %c0_i32, %c0_i32_0 : i32, i32
  }
  func.func @transform_6(%arg0: i32) -> (i32, i32) {
    %c0_i32 = arith.constant 0 : i32
    %c0_i32_0 = arith.constant 0 : i32
    %c0_i32_1 = arith.constant 0 : i32
    return %c0_i32, %c0_i32_0 : i32, i32
  }
  func.func @transform_7(%arg0: i32) -> (i32, i32, i32) {
    %c0_i32 = arith.constant 0 : i32
    %c0_i32_0 = arith.constant 0 : i32
    %c0_i32_1 = arith.constant 0 : i32
    return %arg0, %c0_i32, %c0_i32_0 : i32, i32, i32
  }
  func.func @transform_8(%arg0: i32) -> (i32, i32, i32) {
    %c0_i32 = arith.constant 0 : i32
    %c0_i32_0 = arith.constant 0 : i32
    %c0_i32_1 = arith.constant 0 : i32
    return %arg0, %c0_i32, %c0_i32_0 : i32, i32, i32
  }
}

</mosaic_0001>

<llo_original>
// kernel: attention_forward.1
$region0: #{attention_forward.1}
  #allocation0 [shape = 'u32[]', space=smem, size = 0x4, offset = 0x4, fixed_abs, tag = 'smem constant byte address 0x4 - core index']
  #allocation1 [shape = 'u32[144,128]{1,0:T(1,128)}', space=vmem, size = 0x12000, scoped, tag = 'internal scratch']
  %s0 = inlined_call_operand.vmem [shape: f32[2,8,128], index: 0, kind: input, shape index: {}]
  %s1 = inlined_call_operand.vmem [shape: f32[2,8,128], index: 1, kind: input, shape index: {}]
  %s2 = inlined_call_operand.vmem [shape: f32[128,128], index: 2, kind: input, shape index: {}]
  %s3 = inlined_call_operand.vmem [shape: f32[1,128], index: 3, kind: input, shape index: {}]
  %s4 = inlined_call_operand.vmem [shape: f32[128,128], index: 4, kind: input, shape index: {}]
  %s5 = inlined_call_operand.vmem [shape: f32[128,128], index: 5, kind: input, shape index: {}]
  %s6 = inlined_call_operand.vmem [shape: f32[1,128], index: 6, kind: input, shape index: {}]
  %s7 = inlined_call_operand.hbm [shape: f32[2,8,128], index: 7, kind: output, shape index: {0}]
  %s8 = inlined_call_operand.hbm [shape: f32[2,8,8], index: 8, kind: output, shape index: {1}]
  %9 = xla_tuple %s7, %s8
  %s10 = sld [smem:[#allocation0]]
  $region69: #{attention_forward.1} parent=0
    _
  %s12 = ssub.s32 1, %s10
  %s13 = scalar_select 0, %s12, %s10
  $region1: #{attention_forward.1} parent=0
    #allocation2 [shape = 'u8[8192]{0}', space=vmem, size = 0x2000, scoped, tag = 'output window, operand 0']
    #allocation3 [shape = 's32[2]{0}', space=sflag, size = 0x8, scoped, tag = 'scoped memory for attention_forward.1']
    #allocation4 [shape = 'u8[8192]{0}', space=vmem, size = 0x2000, scoped, tag = 'output window, operand 1']
    #allocation5 [shape = 's32[2]{0}', space=sflag, size = 0x8, scoped, tag = 'scoped memory for attention_forward.1']
    %14 = vsyncpa [#allocation3], 0
    %s15 = scalar_lea.sflag [#allocation3], 1
    %16 = vsyncpa %s15, 0
    %17 = vsyncpa [#allocation5], 0
    %s18 = scalar_lea.sflag [#allocation5], 1
    %19 = vsyncpa %s18, 0
    loop: start=0, step=1, limit=4
    $region2: #{attention_forward.1} parent=1 // loop_pre_header
      _
    $region3: #{attention_forward.1} parent=1 // loop_header
      %s21 = sphi 0, %s25
      %p22 = scmp.ge.s32.totalorder %s21, 4
      %s31 = sphi 0, %s33
      %s34 = sphi 0, %s31
      %s35 = sphi 0, %s34
      %s51 = sphi 0, %s35
      %s57 = sphi 0, %s59
      %s60 = sphi 0, %s57
      %s61 = sphi 0, %s60
      %s77 = sphi 0, %s61
      %s81 = sphi 0, %s81
      %s83 = sphi 0, %s81
      %s84 = sphi 0, %s83
      %s98 = sphi 0, %s84
      %s102 = sphi 0, %s102
      %s104 = sphi 0, %s102
      %s105 = sphi 0, %s104
      %s119 = sphi 0, %s105
      %s123 = sphi 0, %s123
      %s125 = sphi 0, %s123
      %s126 = sphi 0, %s125
      %s140 = sphi 0, %s126
      %s144 = sphi 0, %s144
      %s146 = sphi 0, %s144
      %s147 = sphi 0, %s146
      %s161 = sphi 0, %s147
      %s165 = sphi 0, %s165
      %s167 = sphi 0, %s165
      %s168 = sphi 0, %s167
      %s182 = sphi 0, %s168
      %s188 = sphi 0, %s190
      %s191 = sphi 0, %s188
      %s192 = sphi 0, %s191
      %s208 = sphi 0, %s192
      %s214 = sphi 0, %s216
      %s217 = sphi 0, %s214
      %s218 = sphi 0, %s217
      %s234 = sphi 0, %s218
    $region4: #{attention_forward.1} parent=1 // loop_header_branch
      %24 = sbr.rel (%p22) target = $region8
    $region5: #{attention_forward.1} parent=1 // loop_body
      %s26 = ssub.s32 %s21, 1
      %s27 = ssub.s32 %s21, 2
      %s28 = sadd.s32 %s21, 1
      %s29 = ssub.s32 %s21, %s28
      %p30 = scmp.eq.s32.totalorder %s29, 0
      %s32 = sadd.s32 %s31, 1
      %s33 = scalar_select %p30, %s31, %s32
      %p36 = pneg %p30
      %p37 = scmp.eq.s32.totalorder %s21, 1
      %p38 = por %p36, %p37
      %p39 = scmp.ne.s32.totalorder %s31, %s34
      %p40 = scmp.eq.s32.totalorder %s21, 0
      %p41 = por %p39, %p40
      %p42 = scmp.ne.s32.totalorder %s31, %s34
      %p43 = scmp.eq.s32.totalorder %s26, 1
      %p44 = por %p42, %p43
      %p45 = scmp.ne.s32.totalorder %s34, %s35
      %p46 = scmp.eq.s32.totalorder %s26, 0
      %p47 = por %p45, %p46
      %p48 = scmp.ne.s32.totalorder %s34, %s35
      %p49 = scmp.eq.s32.totalorder %s27, 1
      %p50 = por %p48, %p49
      %p52 = scmp.ne.s32.totalorder %s35, %s51
      %p53 = scmp.eq.s32.totalorder %s27, 0
      %p54 = por %p52, %p53
      %s55 = ssub.s32 %s21, %s28
      %p56 = scmp.eq.s32.totalorder %s55, 0
      %s58 = sadd.s32 %s57, 1
      %s59 = scalar_select %p56, %s57, %s58
      %p62 = pneg %p56
      %p63 = scmp.eq.s32.totalorder %s21, 1
      %p64 = por %p62, %p63
      %p65 = scmp.ne.s32.totalorder %s57, %s60
      %p66 = scmp.eq.s32.totalorder %s21, 0
      %p67 = por %p65, %p66
      %p68 = scmp.ne.s32.totalorder %s57, %s60
      %p69 = scmp.eq.s32.totalorder %s26, 1
      %p70 = por %p68, %p69
      %p71 = scmp.ne.s32.totalorder %s60, %s61
      %p72 = scmp.eq.s32.totalorder %s26, 0
      %p73 = por %p71, %p72
      %p74 = scmp.ne.s32.totalorder %s60, %s61
      %p75 = scmp.eq.s32.totalorder %s27, 1
      %p76 = por %p74, %p75
      %p78 = scmp.ne.s32.totalorder %s61, %s77
      %p79 = scmp.eq.s32.totalorder %s27, 0
      %p80 = por %p78, %p79
      %s82 = sadd.s32 %s81, 1
      %p85 = scmp.eq.s32.totalorder %s21, 1
      %p86 = scmp.ne.s32.totalorder %s81, %s83
      %p87 = scmp.eq.s32.totalorder %s21, 0
      %p88 = por %p86, %p87
      %p89 = scmp.ne.s32.totalorder %s81, %s83
      %p90 = scmp.eq.s32.totalorder %s26, 1
      %p91 = por %p89, %p90
      %p92 = scmp.ne.s32.totalorder %s83, %s84
      %p93 = scmp.eq.s32.totalorder %s26, 0
      %p94 = por %p92, %p93
      %p95 = scmp.ne.s32.totalorder %s83, %s84
      %p96 = scmp.eq.s32.totalorder %s27, 1
      %p97 = por %p95, %p96
      %p99 = scmp.ne.s32.totalorder %s84, %s98
      %p100 = scmp.eq.s32.totalorder %s27, 0
      %p101 = por %p99, %p100
      %s103 = sadd.s32 %s102, 1
      %p106 = scmp.eq.s32.totalorder %s21, 1
      %p107 = scmp.ne.s32.totalorder %s102, %s104
      %p108 = scmp.eq.s32.totalorder %s21, 0
      %p109 = por %p107, %p108
      %p110 = scmp.ne.s32.totalorder %s102, %s104
      %p111 = scmp.eq.s32.totalorder %s26, 1
      %p112 = por %p110, %p111
      %p113 = scmp.ne.s32.totalorder %s104, %s105
      %p114 = scmp.eq.s32.totalorder %s26, 0
      %p115 = por %p113, %p114
      %p116 = scmp.ne.s32.totalorder %s104, %s105
      %p117 = scmp.eq.s32.totalorder %s27, 1
      %p118 = por %p116, %p117
      %p120 = scmp.ne.s32.totalorder %s105, %s119
      %p121 = scmp.eq.s32.totalorder %s27, 0
      %p122 = por %p120, %p121
      %s124 = sadd.s32 %s123, 1
      %p127 = scmp.eq.s32.totalorder %s21, 1
      %p128 = scmp.ne.s32.totalorder %s123, %s125
      %p129 = scmp.eq.s32.totalorder %s21, 0
      %p130 = por %p128, %p129
      %p131 = scmp.ne.s32.totalorder %s123, %s125
      %p132 = scmp.eq.s32.totalorder %s26, 1
      %p133 = por %p131, %p132
      %p134 = scmp.ne.s32.totalorder %s125, %s126
      %p135 = scmp.eq.s32.totalorder %s26, 0
      %p136 = por %p134, %p135
      %p137 = scmp.ne.s32.totalorder %s125, %s126
      %p138 = scmp.eq.s32.totalorder %s27, 1
      %p139 = por %p137, %p138
      %p141 = scmp.ne.s32.totalorder %s126, %s140
      %p142 = scmp.eq.s32.totalorder %s27, 0
      %p143 = por %p141, %p142
      %s145 = sadd.s32 %s144, 1
      %p148 = scmp.eq.s32.totalorder %s21, 1
      %p149 = scmp.ne.s32.totalorder %s144, %s146
      %p150 = scmp.eq.s32.totalorder %s21, 0
      %p151 = por %p149, %p150
      %p152 = scmp.ne.s32.totalorder %s144, %s146
      %p153 = scmp.eq.s32.totalorder %s26, 1
      %p154 = por %p152, %p153
      %p155 = scmp.ne.s32.totalorder %s146, %s147
      %p156 = scmp.eq.s32.totalorder %s26, 0
      %p157 = por %p155, %p156
      %p158 = scmp.ne.s32.totalorder %s146, %s147
      %p159 = scmp.eq.s32.totalorder %s27, 1
      %p160 = por %p158, %p159
      %p162 = scmp.ne.s32.totalorder %s147, %s161
      %p163 = scmp.eq.s32.totalorder %s27, 0
      %p164 = por %p162, %p163
      %s166 = sadd.s32 %s165, 1
      %p169 = scmp.eq.s32.totalorder %s21, 1
      %p170 = scmp.ne.s32.totalorder %s165, %s167
      %p171 = scmp.eq.s32.totalorder %s21, 0
      %p172 = por %p170, %p171
      %p173 = scmp.ne.s32.totalorder %s165, %s167
      %p174 = scmp.eq.s32.totalorder %s26, 1
      %p175 = por %p173, %p174
      %p176 = scmp.ne.s32.totalorder %s167, %s168
      %p177 = scmp.eq.s32.totalorder %s26, 0
      %p178 = por %p176, %p177
      %p179 = scmp.ne.s32.totalorder %s167, %s168
      %p180 = scmp.eq.s32.totalorder %s27, 1
      %p181 = por %p179, %p180
      %p183 = scmp.ne.s32.totalorder %s168, %s182
      %p184 = scmp.eq.s32.totalorder %s27, 0
      %p185 = por %p183, %p184
      %s186 = ssub.s32 %s21, %s28
      %p187 = scmp.eq.s32.totalorder %s186, 0
      %s189 = sadd.s32 %s188, 1
      %s190 = scalar_select %p187, %s188, %s189
      %p193 = pneg %p187
      %p194 = scmp.eq.s32.totalorder %s21, 1
      %p195 = por %p193, %p194
      %p196 = scmp.ne.s32.totalorder %s188, %s191
      %p197 = scmp.eq.s32.totalorder %s21, 0
      %p198 = por %p196, %p197
      %p199 = scmp.ne.s32.totalorder %s188, %s191
      %p200 = scmp.eq.s32.totalorder %s26, 1
      %p201 = por %p199, %p200
      %p202 = scmp.ne.s32.totalorder %s191, %s192
      %p203 = scmp.eq.s32.totalorder %s26, 0
      %p204 = por %p202, %p203
      %p205 = scmp.ne.s32.totalorder %s191, %s192
      %p206 = scmp.eq.s32.totalorder %s27, 1
      %p207 = por %p205, %p206
      %p209 = scmp.ne.s32.totalorder %s192, %s208
      %p210 = scmp.eq.s32.totalorder %s27, 0
      %p211 = por %p209, %p210
      %s212 = ssub.s32 %s21, %s28
      %p213 = scmp.eq.s32.totalorder %s212, 0
      %s215 = sadd.s32 %s214, 1
      %s216 = scalar_select %p213, %s214, %s215
      %p219 = pneg %p213
      %p220 = scmp.eq.s32.totalorder %s21, 1
      %p221 = por %p219, %p220
      %p222 = scmp.ne.s32.totalorder %s214, %s217
      %p223 = scmp.eq.s32.totalorder %s21, 0
      %p224 = por %p222, %p223
      %p225 = scmp.ne.s32.totalorder %s214, %s217
      %p226 = scmp.eq.s32.totalorder %s26, 1
      %p227 = por %p225, %p226
      %p228 = scmp.ne.s32.totalorder %s217, %s218
      %p229 = scmp.eq.s32.totalorder %s26, 0
      %p230 = por %p228, %p229
      %p231 = scmp.ne.s32.totalorder %s217, %s218
      %p232 = scmp.eq.s32.totalorder %s27, 1
      %p233 = por %p231, %p232
      %p235 = scmp.ne.s32.totalorder %s218, %s234
      %p236 = scmp.eq.s32.totalorder %s27, 0
      %p237 = por %p235, %p236
      %p238 = scmp.le.s32.totalorder 1, %s21
      %p239 = scmp.lt.s32.totalorder %s21, 3
      %p240 = pnand %p238, %p239
      %p241 = pneg %p240
      // Predicated region
      $region9: #{attention_forward.1} parent=5 // pred_check
        _
      $region10: #{attention_forward.1} parent=5 // pred_check_branch
        %243 = sbr.rel (%p240) target = $region12
      $region11: #{attention_forward.1} parent=5 // pred_region
        %s244 = ssub.s32 %s21, 1
        // Predicated region
        $region13: #{attention_forward.1} parent=11 // pred_check
          %p245 = pneg %p94
        $region14: #{attention_forward.1} parent=11 // pred_check_branch
          %247 = sbr.rel (%p245) target = $region16
        $region15: #{attention_forward.1} parent=11 // pred_region
          _
        $region16: #{attention_forward.1} parent=11 // pred_fallthru
          _
        // Predicated region
        $region17: #{attention_forward.1} parent=11 // pred_check
          %p248 = pneg %p115
        $region18: #{attention_forward.1} parent=11 // pred_check_branch
          %250 = sbr.rel (%p248) target = $region20
        $region19: #{attention_forward.1} parent=11 // pred_region
          _
        $region20: #{attention_forward.1} parent=11 // pred_fallthru
          _
        // Predicated region
        $region21: #{attention_forward.1} parent=11 // pred_check
          %p251 = pneg %p136
        $region22: #{attention_forward.1} parent=11 // pred_check_branch
          %253 = sbr.rel (%p251) target = $region24
        $region23: #{attention_forward.1} parent=11 // pred_region
          _
        $region24: #{attention_forward.1} parent=11 // pred_fallthru
          _
        // Predicated region
        $region25: #{attention_forward.1} parent=11 // pred_check
          %p254 = pneg %p157
        $region26: #{attention_forward.1} parent=11 // pred_check_branch
          %256 = sbr.rel (%p254) target = $region28
        $region27: #{attention_forward.1} parent=11 // pred_region
          _
        $region28: #{attention_forward.1} parent=11 // pred_fallthru
          _
        // Predicated region
        $region29: #{attention_forward.1} parent=11 // pred_check
          %p257 = pneg %p178
        $region30: #{attention_forward.1} parent=11 // pred_check_branch
          %259 = sbr.rel (%p257) target = $region32
        $region31: #{attention_forward.1} parent=11 // pred_region
          _
        $region32: #{attention_forward.1} parent=11 // pred_fallthru
          _
      $region12: #{attention_forward.1} parent=5 // pred_fallthru
        _
      %p260 = scmp.lt.s32.totalorder %s21, 2
      // Predicated region
      $region33: #{attention_forward.1} parent=5 // pred_check
        %p261 = pneg %p260
      $region34: #{attention_forward.1} parent=5 // pred_check_branch
        %263 = sbr.rel (%p261) target = $region36
      $region35: #{attention_forward.1} parent=5 // pred_region
        // Predicated region
        $region37: #{attention_forward.1} parent=35 // pred_check
          %p264 = pneg %p41
        $region38: #{attention_forward.1} parent=35 // pred_check_branch
          %266 = sbr.rel (%p264) target = $region40
        $region39: #{attention_forward.1} parent=35 // pred_region
          %p267 = scmp.lt.s32.totalorder %s21, 1
          %s268 = scalar_select %p267, %s21, 1
          %s269 = smul.addr %s268, 8
          %s270 = scalar_lea.vmem %s0, %s269
        $region40: #{attention_forward.1} parent=35 // pred_fallthru
          _
        // Predicated region
        $region41: #{attention_forward.1} parent=35 // pred_check
          %p271 = pneg %p67
        $region42: #{attention_forward.1} parent=35 // pred_check_branch
          %273 = sbr.rel (%p271) target = $region44
        $region43: #{attention_forward.1} parent=35 // pred_region
          %p274 = scmp.lt.s32.totalorder %s21, 1
          %s275 = scalar_select %p274, %s21, 1
          %s276 = smul.addr %s275, 8
          %s277 = scalar_lea.vmem %s1, %s276
        $region44: #{attention_forward.1} parent=35 // pred_fallthru
          _
      $region36: #{attention_forward.1} parent=5 // pred_fallthru
        _
      %p278 = scmp.le.s32.totalorder 1, %s21
      %p279 = scmp.lt.s32.totalorder %s21, 3
      %p280 = pnand %p278, %p279
      %p281 = pneg %p280
      // Predicated region
      $region45: #{attention_forward.1} parent=5 // pred_check
        _
      $region46: #{attention_forward.1} parent=5 // pred_check_branch
        %283 = sbr.rel (%p280) target = $region48
      $region47: #{attention_forward.1} parent=5 // pred_region
        %s284 = ssub.s32 %s21, 1
        %p285 = scmp.lt.s32.totalorder %s26, 1
        %s286 = scalar_select %p285, %s26, 1
        %s287 = smul.addr %s286, 8
        %s288 = scalar_lea.vmem %s0, %s287
        %p289 = pneg %p47
        %p290 = pneg %p44
        %p291 = scmp.lt.s32.totalorder %s26, 1
        %s292 = scalar_select %p291, %s26, 1
        %s293 = smul.addr %s292, 8
        %s294 = scalar_lea.vmem %s1, %s293
        %p295 = pneg %p73
        %p296 = pneg %p70
        %p297 = pneg %p94
        %p298 = pneg %p91
        %p299 = pneg %p115
        %p300 = pneg %p112
        %p301 = pneg %p136
        %p302 = pneg %p133
        %p303 = pneg %p157
        %p304 = pneg %p154
        %p305 = pneg %p178
        %p306 = pneg %p175
        %p307 = pneg %p204
        %p308 = pneg %p201
        %s309 = sand.u32 %s191, 1
        %s310 = scalar_lea.sflag [#allocation3], %s309
        %s311 = sand.u32 %s191, 1
        %s312 = smul.addr %s311, 8
        %s313 = scalar_lea.vmem [#allocation2], %s312
        %p314 = pneg %p230
        %p315 = pneg %p227
        %s316 = sand.u32 %s217, 1
        %s317 = scalar_lea.sflag [#allocation5], %s316
        %s318 = sand.u32 %s217, 1
        %s319 = smul.addr %s318, 8
        %s320 = scalar_lea.vmem [#allocation4], %s319
        %p321 = scmp.lt.s32.totalorder %s26, 1
        %s322 = scalar_select %p321, %s26, 1
        %s323 = smul.addr %s322, 8
        %s324 = scalar_lea.vmem %s0, %s323
        %p325 = scmp.lt.s32.totalorder %s26, 1
        %s326 = scalar_select %p325, %s26, 1
        %s327 = smul.addr %s326, 8
        %s328 = scalar_lea.vmem %s1, %s327
        %v329 = vld [vmem:[%s324] sm:$0xff]
        %v330 = vld [vmem:[%s328] sm:$0xff]
        %v331 = vld [vmem:[%s2] sm:$0xff]
        %v332 = vld [vmem:[%s2 + $0x8] sm:$0xff]
        %v333 = vld [vmem:[%s2 + $0x10] sm:$0xff]
        %v334 = vld [vmem:[%s2 + $0x18] sm:$0xff]
        %v335 = vld [vmem:[%s2 + $0x20] sm:$0xff]
        %v336 = vld [vmem:[%s2 + $0x28] sm:$0xff]
        %v337 = vld [vmem:[%s2 + $0x30] sm:$0xff]
        %v338 = vld [vmem:[%s2 + $0x38] sm:$0xff]
        %v339 = vld [vmem:[%s2 + $0x40] sm:$0xff]
        %v340 = vld [vmem:[%s2 + $0x48] sm:$0xff]
        %v341 = vld [vmem:[%s2 + $0x50] sm:$0xff]
        %v342 = vld [vmem:[%s2 + $0x58] sm:$0xff]
        %v343 = vld [vmem:[%s2 + $0x60] sm:$0xff]
        %v344 = vld [vmem:[%s2 + $0x68] sm:$0xff]
        %v345 = vld [vmem:[%s2 + $0x70] sm:$0xff]
        %v346 = vld [vmem:[%s2 + $0x78] sm:$0xff]
        %v347 = vld [vmem:[%s3] sm:$0x1]
        %v349 = vlaneseq
        %v350 = vshrl.u32 %v349, 7
        %v351 = vsub.s32 0, %v350
        %v352 = vrot.slane %v347, %v351
        %354 = vmatprep.subr.mxu0 0.0
        %355 = vmatpush1.msra.mxu0 %v346
        %356 = vmatprep.subr.mxu0 0.0
        %357 = vmatpush1.msra.mxu0 %v345
        %358 = vmatprep.subr.mxu0 0.0
        %359 = vmatpush1.msra.mxu0 %v344
        %360 = vmatprep.subr.mxu0 0.0
        %361 = vmatpush1.msra.mxu0 %v343
        %362 = vmatprep.subr.mxu0 0.0
        %363 = vmatpush1.msra.mxu0 %v342
        %364 = vmatprep.subr.mxu0 0.0
        %365 = vmatpush1.msra.mxu0 %v341
        %366 = vmatprep.subr.mxu0 0.0
        %367 = vmatpush1.msra.mxu0 %v340
        %368 = vmatprep.subr.mxu0 0.0
        %369 = vmatpush1.msra.mxu0 %v339
        %370 = vmatprep.subr.mxu0 0.0
        %371 = vmatpush1.msra.mxu0 %v338
        %372 = vmatprep.subr.mxu0 0.0
        %373 = vmatpush1.msra.mxu0 %v337
        %374 = vmatprep.subr.mxu0 0.0
        %375 = vmatpush1.msra.mxu0 %v336
        %376 = vmatprep.subr.mxu0 0.0
        %377 = vmatpush1.msra.mxu0 %v335
        %378 = vmatprep.subr.mxu0 0.0
        %379 = vmatpush1.msra.mxu0 %v334
        %380 = vmatprep.subr.mxu0 0.0
        %381 = vmatpush1.msra.mxu0 %v333
        %382 = vmatprep.subr.mxu0 0.0
        %383 = vmatpush1.msra.mxu0 %v332
        %384 = vmatprep.subr.mxu0 0.0
        %385 = vmatpush1.msra.mxu0 %v331
        %386 = vmatprep.subr.mxu0 0.0
        %387 = vmatpush2.msra.mxu0 0.0
        %388 = vmatprep.subr.mxu0 0.0
        %389 = vmatpush2.msra.mxu0 0.0
        %390 = vmatprep.subr.mxu0 0.0
        %391 = vmatpush2.msra.mxu0 0.0
        %392 = vmatprep.subr.mxu0 0.0
        %393 = vmatpush2.msra.mxu0 0.0
        %394 = vmatprep.subr.mxu0 0.0
        %395 = vmatpush2.msra.mxu0 0.0
        %396 = vmatprep.subr.mxu0 0.0
        %397 = vmatpush2.msra.mxu0 0.0
        %398 = vmatprep.subr.mxu0 0.0
        %399 = vmatpush2.msra.mxu0 0.0
        %400 = vmatprep.subr.mxu0 0.0
        %401 = vmatpush2.msra.mxu0 0.0
        %402 = vmatprep.subr.mxu0 0.0
        %403 = vmatpush2.msra.mxu0 0.0
        %404 = vmatprep.subr.mxu0 0.0
        %405 = vmatpush2.msra.mxu0 0.0
        %406 = vmatprep.subr.mxu0 0.0
        %407 = vmatpush2.msra.mxu0 0.0
        %408 = vmatprep.subr.mxu0 0.0
        %409 = vmatpush2.msra.mxu0 0.0
        %410 = vmatprep.subr.mxu0 0.0
        %411 = vmatpush2.msra.mxu0 0.0
        %412 = vmatprep.subr.mxu0 0.0
        %413 = vmatpush2.msra.mxu0 0.0
        %414 = vmatprep.subr.mxu0 0.0
        %415 = vmatpush2.msra.mxu0 0.0
        %416 = vmatprep.subr.mxu0 0.0
        %417 = vmatpush2.msra.mxu0 0.0
        %418 = vmatprep.mubr.f32.mxu0 0.0
        %419 = vmatmul.mubr.f32.gmra.mxu0 %v329
        %v420 = vpop.f32.mrf.mxu0
        %v421 = vadd.f32 %v352, %v420
        %v422 = vpop.f32.mrf.mxu0
        %423 = vdwg.mxu0
        %424 = vmatprep.subr.mxu0 0.0
        %425 = vmatpush1.xpose.msra.mxu0 0.0
        %426 = vmatprep.subr.mxu0 0.0
        %427 = vmatpush1.xpose.msra.mxu0 0.0
        %428 = vmatprep.subr.mxu0 0.0
        %429 = vmatpush1.xpose.msra.mxu0 0.0
        %430 = vmatprep.subr.mxu0 0.0
        %431 = vmatpush1.xpose.msra.mxu0 0.0
        %432 = vmatprep.subr.mxu0 0.0
        %433 = vmatpush1.xpose.msra.mxu0 0.0
        %434 = vmatprep.subr.mxu0 0.0
        %435 = vmatpush1.xpose.msra.mxu0 0.0
        %436 = vmatprep.subr.mxu0 0.0
        %437 = vmatpush1.xpose.msra.mxu0 0.0
        %438 = vmatprep.subr.mxu0 0.0
        %439 = vmatpush1.xpose.msra.mxu0 0.0
        %440 = vmatprep.subr.mxu0 0.0
        %441 = vmatpush1.xpose.msra.mxu0 0.0
        %442 = vmatprep.subr.mxu0 0.0
        %443 = vmatpush1.xpose.msra.mxu0 0.0
        %444 = vmatprep.subr.mxu0 0.0
        %445 = vmatpush1.xpose.msra.mxu0 0.0
        %446 = vmatprep.subr.mxu0 0.0
        %447 = vmatpush1.xpose.msra.mxu0 0.0
        %448 = vmatprep.subr.mxu0 0.0
        %449 = vmatpush1.xpose.msra.mxu0 0.0
        %450 = vmatprep.subr.mxu0 0.0
        %451 = vmatpush1.xpose.msra.mxu0 0.0
        %452 = vmatprep.subr.mxu0 0.0
        %453 = vmatpush1.xpose.msra.mxu0 0.0
        %454 = vmatprep.subr.mxu0 0.0
        %455 = vmatpush1.xpose.msra.mxu0 %v330
        %456 = vmatprep.subr.mxu0 0.0
        %457 = vmatpush2.xpose.msra.mxu0 0.0
        %458 = vmatprep.subr.mxu0 0.0
        %459 = vmatpush2.xpose.msra.mxu0 0.0
        %460 = vmatprep.subr.mxu0 0.0
        %461 = vmatpush2.xpose.msra.mxu0 0.0
        %462 = vmatprep.subr.mxu0 0.0
        %463 = vmatpush2.xpose.msra.mxu0 0.0
        %464 = vmatprep.subr.mxu0 0.0
        %465 = vmatpush2.xpose.msra.mxu0 0.0
        %466 = vmatprep.subr.mxu0 0.0
        %467 = vmatpush2.xpose.msra.mxu0 0.0
        %468 = vmatprep.subr.mxu0 0.0
        %469 = vmatpush2.xpose.msra.mxu0 0.0
        %470 = vmatprep.subr.mxu0 0.0
        %471 = vmatpush2.xpose.msra.mxu0 0.0
        %472 = vmatprep.subr.mxu0 0.0
        %473 = vmatpush2.xpose.msra.mxu0 0.0
        %474 = vmatprep.subr.mxu0 0.0
        %475 = vmatpush2.xpose.msra.mxu0 0.0
        %476 = vmatprep.subr.mxu0 0.0
        %477 = vmatpush2.xpose.msra.mxu0 0.0
        %478 = vmatprep.subr.mxu0 0.0
        %479 = vmatpush2.xpose.msra.mxu0 0.0
        %480 = vmatprep.subr.mxu0 0.0
        %481 = vmatpush2.xpose.msra.mxu0 0.0
        %482 = vmatprep.subr.mxu0 0.0
        %483 = vmatpush2.xpose.msra.mxu0 0.0
        %484 = vmatprep.subr.mxu0 0.0
        %485 = vmatpush2.xpose.msra.mxu0 0.0
        %486 = vmatprep.subr.mxu0 0.0
        %487 = vmatpush2.xpose.msra.mxu0 0.0
        %488 = vmatprep.mubr.f32.mxu0 0.0
        %489 = vmatmul.mubr.f32.gmra.mxu0 %v421
        %v490 = vpop.f32.mrf.mxu0
        %v491 = vadd.f32 0.0, %v490
        %v492 = vpop.f32.mrf.mxu0
        %493 = vdwg.mxu0
        %vm494 = vcmask 64512
        %v495 = vsel %vm494, %v491, -inf
        %496 = vmax.xlane.f32.xlu0 %v495
        %v497 = vpop.xlane.xlu0 %496
        %v498 = vsub.f32 %v491, %v497
        %v499 = vmul.f32 %v498, 1.442695
        %v500 = vpow.pop %v499
        %v501 = vsel %vm494, %v500, 0.0
        %502 = vadd.xlane.f32.xlu0 %v501
        %v503 = vpop.xlane.xlu0 %502
        %v504 = vrcp.pop %v503
        %v505 = vmul.f32 %v500, %v504
        %v507 = vsel %vm494, %v505, 0
        %509 = vmatprep.subr.mxu0 0.0
        %510 = vmatpush1.msra.mxu0 0.0
        %511 = vmatprep.subr.mxu0 0.0
        %512 = vmatpush1.msra.mxu0 0.0
        %513 = vmatprep.subr.mxu0 0.0
        %514 = vmatpush1.msra.mxu0 0.0
        %515 = vmatprep.subr.mxu0 0.0
        %516 = vmatpush1.msra.mxu0 0.0
        %517 = vmatprep.subr.mxu0 0.0
        %518 = vmatpush1.msra.mxu0 0.0
        %519 = vmatprep.subr.mxu0 0.0
        %520 = vmatpush1.msra.mxu0 0.0
        %521 = vmatprep.subr.mxu0 0.0
        %522 = vmatpush1.msra.mxu0 0.0
        %523 = vmatprep.subr.mxu0 0.0
        %524 = vmatpush1.msra.mxu0 0.0
        %525 = vmatprep.subr.mxu0 0.0
        %526 = vmatpush1.msra.mxu0 0.0
        %527 = vmatprep.subr.mxu0 0.0
        %528 = vmatpush1.msra.mxu0 0.0
        %529 = vmatprep.subr.mxu0 0.0
        %530 = vmatpush1.msra.mxu0 0.0
        %531 = vmatprep.subr.mxu0 0.0
        %532 = vmatpush1.msra.mxu0 0.0
        %533 = vmatprep.subr.mxu0 0.0
        %534 = vmatpush1.msra.mxu0 0.0
        %535 = vmatprep.subr.mxu0 0.0
        %536 = vmatpush1.msra.mxu0 0.0
        %537 = vmatprep.subr.mxu0 0.0
        %538 = vmatpush1.msra.mxu0 0.0
        %539 = vmatprep.subr.mxu0 0.0
        %540 = vmatpush1.msra.mxu0 %v330
        %541 = vmatprep.subr.mxu0 0.0
        %542 = vmatpush2.msra.mxu0 0.0
        %543 = vmatprep.subr.mxu0 0.0
        %544 = vmatpush2.msra.mxu0 0.0
        %545 = vmatprep.subr.mxu0 0.0
        %546 = vmatpush2.msra.mxu0 0.0
        %547 = vmatprep.subr.mxu0 0.0
        %548 = vmatpush2.msra.mxu0 0.0
        %549 = vmatprep.subr.mxu0 0.0
        %550 = vmatpush2.msra.mxu0 0.0
        %551 = vmatprep.subr.mxu0 0.0
        %552 = vmatpush2.msra.mxu0 0.0
        %553 = vmatprep.subr.mxu0 0.0
        %554 = vmatpush2.msra.mxu0 0.0
        %555 = vmatprep.subr.mxu0 0.0
        %556 = vmatpush2.msra.mxu0 0.0
        %557 = vmatprep.subr.mxu0 0.0
        %558 = vmatpush2.msra.mxu0 0.0
        %559 = vmatprep.subr.mxu0 0.0
        %560 = vmatpush2.msra.mxu0 0.0
        %561 = vmatprep.subr.mxu0 0.0
        %562 = vmatpush2.msra.mxu0 0.0
        %563 = vmatprep.subr.mxu0 0.0
        %564 = vmatpush2.msra.mxu0 0.0
        %565 = vmatprep.subr.mxu0 0.0
        %566 = vmatpush2.msra.mxu0 0.0
        %567 = vmatprep.subr.mxu0 0.0
        %568 = vmatpush2.msra.mxu0 0.0
        %569 = vmatprep.subr.mxu0 0.0
        %570 = vmatpush2.msra.mxu0 0.0
        %571 = vmatprep.subr.mxu0 0.0
        %572 = vmatpush2.msra.mxu0 0.0
        %573 = vmatprep.mubr.f32.mxu0 0.0
        %574 = vmatmul.mubr.f32.gmra.mxu0 %v507
        %v575 = vpop.f32.mrf.mxu0
        %v576 = vadd.f32 0.0, %v575
        %v577 = vpop.f32.mrf.mxu0
        %578 = vdwg.mxu0
        %v579 = vld [vmem:[%s4] sm:$0xff]
        %v580 = vld [vmem:[%s4 + $0x8] sm:$0xff]
        %v581 = vld [vmem:[%s4 + $0x10] sm:$0xff]
        %v582 = vld [vmem:[%s4 + $0x18] sm:$0xff]
        %v583 = vld [vmem:[%s4 + $0x20] sm:$0xff]
        %v584 = vld [vmem:[%s4 + $0x28] sm:$0xff]
        %v585 = vld [vmem:[%s4 + $0x30] sm:$0xff]
        %v586 = vld [vmem:[%s4 + $0x38] sm:$0xff]
        %v587 = vld [vmem:[%s4 + $0x40] sm:$0xff]
        %v588 = vld [vmem:[%s4 + $0x48] sm:$0xff]
        %v589 = vld [vmem:[%s4 + $0x50] sm:$0xff]
        %v590 = vld [vmem:[%s4 + $0x58] sm:$0xff]
        %v591 = vld [vmem:[%s4 + $0x60] sm:$0xff]
        %v592 = vld [vmem:[%s4 + $0x68] sm:$0xff]
        %v593 = vld [vmem:[%s4 + $0x70] sm:$0xff]
        %v594 = vld [vmem:[%s4 + $0x78] sm:$0xff]
        %v595 = vld [vmem:[%s5] sm:$0xff]
        %v596 = vld [vmem:[%s5 + $0x8] sm:$0xff]
        %v597 = vld [vmem:[%s5 + $0x10] sm:$0xff]
        %v598 = vld [vmem:[%s5 + $0x18] sm:$0xff]
        %v599 = vld [vmem:[%s5 + $0x20] sm:$0xff]
        %v600 = vld [vmem:[%s5 + $0x28] sm:$0xff]
        %v601 = vld [vmem:[%s5 + $0x30] sm:$0xff]
        %v602 = vld [vmem:[%s5 + $0x38] sm:$0xff]
        %v603 = vld [vmem:[%s5 + $0x40] sm:$0xff]
        %v604 = vld [vmem:[%s5 + $0x48] sm:$0xff]
        %v605 = vld [vmem:[%s5 + $0x50] sm:$0xff]
        %v606 = vld [vmem:[%s5 + $0x58] sm:$0xff]
        %v607 = vld [vmem:[%s5 + $0x60] sm:$0xff]
        %v608 = vld [vmem:[%s5 + $0x68] sm:$0xff]
        %v609 = vld [vmem:[%s5 + $0x70] sm:$0xff]
        %v610 = vld [vmem:[%s5 + $0x78] sm:$0xff]
        %611 = vmatprep.subr.mxu0 0.0
        %612 = vmatpush1.msra.mxu0 %v610
        %613 = vmatprep.subr.mxu0 0.0
        %614 = vmatpush1.msra.mxu0 %v609
        %615 = vmatprep.subr.mxu0 0.0
        %616 = vmatpush1.msra.mxu0 %v608
        %617 = vmatprep.subr.mxu0 0.0
        %618 = vmatpush1.msra.mxu0 %v607
        %619 = vmatprep.subr.mxu0 0.0
        %620 = vmatpush1.msra.mxu0 %v606
        %621 = vmatprep.subr.mxu0 0.0
        %622 = vmatpush1.msra.mxu0 %v605
        %623 = vmatprep.subr.mxu0 0.0
        %624 = vmatpush1.msra.mxu0 %v604
        %625 = vmatprep.subr.mxu0 0.0
        %626 = vmatpush1.msra.mxu0 %v603
        %627 = vmatprep.subr.mxu0 0.0
        %628 = vmatpush1.msra.mxu0 %v602
        %629 = vmatprep.subr.mxu0 0.0
        %630 = vmatpush1.msra.mxu0 %v601
        %631 = vmatprep.subr.mxu0 0.0
        %632 = vmatpush1.msra.mxu0 %v600
        %633 = vmatprep.subr.mxu0 0.0
        %634 = vmatpush1.msra.mxu0 %v599
        %635 = vmatprep.subr.mxu0 0.0
        %636 = vmatpush1.msra.mxu0 %v598
        %637 = vmatprep.subr.mxu0 0.0
        %638 = vmatpush1.msra.mxu0 %v597
        %639 = vmatprep.subr.mxu0 0.0
        %640 = vmatpush1.msra.mxu0 %v596
        %641 = vmatprep.subr.mxu0 0.0
        %642 = vmatpush1.msra.mxu0 %v595
        %643 = vmatprep.subr.mxu0 0.0
        %644 = vmatpush2.msra.mxu0 0.0
        %645 = vmatprep.subr.mxu0 0.0
        %646 = vmatpush2.msra.mxu0 0.0
        %647 = vmatprep.subr.mxu0 0.0
        %648 = vmatpush2.msra.mxu0 0.0
        %649 = vmatprep.subr.mxu0 0.0
        %650 = vmatpush2.msra.mxu0 0.0
        %651 = vmatprep.subr.mxu0 0.0
        %652 = vmatpush2.msra.mxu0 0.0
        %653 = vmatprep.subr.mxu0 0.0
        %654 = vmatpush2.msra.mxu0 0.0
        %655 = vmatprep.subr.mxu0 0.0
        %656 = vmatpush2.msra.mxu0 0.0
        %657 = vmatprep.subr.mxu0 0.0
        %658 = vmatpush2.msra.mxu0 0.0
        %659 = vmatprep.subr.mxu0 0.0
        %660 = vmatpush2.msra.mxu0 0.0
        %661 = vmatprep.subr.mxu0 0.0
        %662 = vmatpush2.msra.mxu0 0.0
        %663 = vmatprep.subr.mxu0 0.0
        %664 = vmatpush2.msra.mxu0 0.0
        %665 = vmatprep.subr.mxu0 0.0
        %666 = vmatpush2.msra.mxu0 0.0
        %667 = vmatprep.subr.mxu0 0.0
        %668 = vmatpush2.msra.mxu0 0.0
        %669 = vmatprep.subr.mxu0 0.0
        %670 = vmatpush2.msra.mxu0 0.0
        %671 = vmatprep.subr.mxu0 0.0
        %672 = vmatpush2.msra.mxu0 0.0
        %673 = vmatprep.subr.mxu0 0.0
        %674 = vmatpush2.msra.mxu0 0.0
        %675 = vmatprep.mubr.f32.mxu0 0.0
        %676 = vmatmul.mubr.f32.gmra.mxu0 %v329
        %v677 = vpop.f32.mrf.mxu0
        %v678 = vadd.f32 0.0, %v677
        %v679 = vpop.f32.mrf.mxu0
        %680 = vdwg.mxu0
        %681 = vmatprep.subr.mxu0 0.0
        %682 = vmatpush1.msra.mxu0 %v594
        %683 = vmatprep.subr.mxu0 0.0
        %684 = vmatpush1.msra.mxu0 %v593
        %685 = vmatprep.subr.mxu0 0.0
        %686 = vmatpush1.msra.mxu0 %v592
        %687 = vmatprep.subr.mxu0 0.0
        %688 = vmatpush1.msra.mxu0 %v591
        %689 = vmatprep.subr.mxu0 0.0
        %690 = vmatpush1.msra.mxu0 %v590
        %691 = vmatprep.subr.mxu0 0.0
        %692 = vmatpush1.msra.mxu0 %v589
        %693 = vmatprep.subr.mxu0 0.0
        %694 = vmatpush1.msra.mxu0 %v588
        %695 = vmatprep.subr.mxu0 0.0
        %696 = vmatpush1.msra.mxu0 %v587
        %697 = vmatprep.subr.mxu0 0.0
        %698 = vmatpush1.msra.mxu0 %v586
        %699 = vmatprep.subr.mxu0 0.0
        %700 = vmatpush1.msra.mxu0 %v585
        %701 = vmatprep.subr.mxu0 0.0
        %702 = vmatpush1.msra.mxu0 %v584
        %703 = vmatprep.subr.mxu0 0.0
        %704 = vmatpush1.msra.mxu0 %v583
        %705 = vmatprep.subr.mxu0 0.0
        %706 = vmatpush1.msra.mxu0 %v582
        %707 = vmatprep.subr.mxu0 0.0
        %708 = vmatpush1.msra.mxu0 %v581
        %709 = vmatprep.subr.mxu0 0.0
        %710 = vmatpush1.msra.mxu0 %v580
        %711 = vmatprep.subr.mxu0 0.0
        %712 = vmatpush1.msra.mxu0 %v579
        %713 = vmatprep.subr.mxu0 0.0
        %714 = vmatpush2.msra.mxu0 0.0
        %715 = vmatprep.subr.mxu0 0.0
        %716 = vmatpush2.msra.mxu0 0.0
        %717 = vmatprep.subr.mxu0 0.0
        %718 = vmatpush2.msra.mxu0 0.0
        %719 = vmatprep.subr.mxu0 0.0
        %720 = vmatpush2.msra.mxu0 0.0
        %721 = vmatprep.subr.mxu0 0.0
        %722 = vmatpush2.msra.mxu0 0.0
        %723 = vmatprep.subr.mxu0 0.0
        %724 = vmatpush2.msra.mxu0 0.0
        %725 = vmatprep.subr.mxu0 0.0
        %726 = vmatpush2.msra.mxu0 0.0
        %727 = vmatprep.subr.mxu0 0.0
        %728 = vmatpush2.msra.mxu0 0.0
        %729 = vmatprep.subr.mxu0 0.0
        %730 = vmatpush2.msra.mxu0 0.0
        %731 = vmatprep.subr.mxu0 0.0
        %732 = vmatpush2.msra.mxu0 0.0
        %733 = vmatprep.subr.mxu0 0.0
        %734 = vmatpush2.msra.mxu0 0.0
        %735 = vmatprep.subr.mxu0 0.0
        %736 = vmatpush2.msra.mxu0 0.0
        %737 = vmatprep.subr.mxu0 0.0
        %738 = vmatpush2.msra.mxu0 0.0
        %739 = vmatprep.subr.mxu0 0.0
        %740 = vmatpush2.msra.mxu0 0.0
        %741 = vmatprep.subr.mxu0 0.0
        %742 = vmatpush2.msra.mxu0 0.0
        %743 = vmatprep.subr.mxu0 0.0
        %744 = vmatpush2.msra.mxu0 0.0
        %745 = vmatprep.mubr.f32.mxu0 0.0
        %746 = vmatmul.mubr.f32.gmra.mxu0 %v576
        %v747 = vpop.f32.mrf.mxu0
        %v748 = vadd.f32 %v678, %v747
        %v749 = vpop.f32.mrf.mxu0
        %750 = vdwg.mxu0
        %v751 = vld [vmem:[%s6] sm:$0x1]
        %v753 = vlaneseq
        %v754 = vshrl.u32 %v753, 7
        %v755 = vsub.s32 0, %v754
        %v756 = vrot.slane %v751, %v755
        %v758 = vadd.f32 %v748, %v756
        %v759 = vtanh.pop %v758
        %760 = vst [vmem:[%s313] sm:$0xff] %v759
        %761 = vst.msk [vmem:[%s320] sm:$0xff] %vm494, %v505
        %s762 = sand.u32 %s191, 1
        %s763 = scalar_lea.sflag [#allocation3], %s762
        %s764 = sand.u32 %s191, 1
        %s765 = smul.addr %s764, 8
        %s766 = scalar_lea.vmem [#allocation2], %s765
        %s767 = sand.u32 %s217, 1
        %s768 = scalar_lea.sflag [#allocation5], %s767
        %s769 = sand.u32 %s217, 1
        %s770 = smul.addr %s769, 8
        %s771 = scalar_lea.vmem [#allocation4], %s770
        // Predicated region
        $region49: #{attention_forward.1} parent=47 // pred_check
          %p772 = pneg %p201
        $region50: #{attention_forward.1} parent=47 // pred_check_branch
          %774 = sbr.rel (%p772) target = $region52
        $region51: #{attention_forward.1} parent=47 // pred_region
          %s776 = ssub.s32 128, 128
          %777 = vsyncadd %s763, %s776
          %s778 = smul.addr %s26, 128
          %s779 = scalar_lea.hbm %s7, %s778
          %s781 = sshll.u32 %s766, 4
          %s782 = int_to_ptr.vmem [resolvable:$true] %s781
          %784 = dma.vmem_to_hbm [thread:$0]  %s782, 128, %s779, %s763
        $region52: #{attention_forward.1} parent=47 // pred_fallthru
          _
        // Predicated region
        $region53: #{attention_forward.1} parent=47 // pred_check
          %p785 = pneg %p227
        $region54: #{attention_forward.1} parent=47 // pred_check_branch
          %787 = sbr.rel (%p785) target = $region56
        $region55: #{attention_forward.1} parent=47 // pred_region
          %s789 = ssub.s32 128, 128
          %790 = vsyncadd %s768, %s789
          %s791 = smul.addr %s26, 128
          %s792 = scalar_lea.hbm %s8, %s791
          %s794 = sshll.u32 %s771, 4
          %s795 = int_to_ptr.vmem [resolvable:$true] %s794
          %797 = dma.vmem_to_hbm [thread:$0]  %s795, 128, %s792, %s768
        $region56: #{attention_forward.1} parent=47 // pred_fallthru
          _
      $region48: #{attention_forward.1} parent=5 // pred_fallthru
        _
      %p798 = scmp.le.s32.totalorder 2, %s21
      // Predicated region
      $region57: #{attention_forward.1} parent=5 // pred_check
        %p799 = pneg %p798
      $region58: #{attention_forward.1} parent=5 // pred_check_branch
        %801 = sbr.rel (%p799) target = $region60
      $region59: #{attention_forward.1} parent=5 // pred_region
        %s802 = ssub.s32 %s21, 2
        // Predicated region
        $region61: #{attention_forward.1} parent=59 // pred_check
          %p803 = pneg %p207
        $region62: #{attention_forward.1} parent=59 // pred_check_branch
          %805 = sbr.rel (%p803) target = $region64
        $region63: #{attention_forward.1} parent=59 // pred_region
          %s806 = sand.u32 %s192, 1
          %s807 = scalar_lea.sflag [#allocation3], %s806
          %s808 = sand.u32 %s192, 1
          %s809 = smul.addr %s808, 8
          %s810 = scalar_lea.vmem [#allocation2], %s809
          %811 = dma.done %s807, 128
        $region64: #{attention_forward.1} parent=59 // pred_fallthru
          _
        // Predicated region
        $region65: #{attention_forward.1} parent=59 // pred_check
          %p812 = pneg %p233
        $region66: #{attention_forward.1} parent=59 // pred_check_branch
          %814 = sbr.rel (%p812) target = $region68
        $region67: #{attention_forward.1} parent=59 // pred_region
          %s815 = sand.u32 %s218, 1
          %s816 = scalar_lea.sflag [#allocation5], %s815
          %s817 = sand.u32 %s218, 1
          %s818 = smul.addr %s817, 8
          %s819 = scalar_lea.vmem [#allocation4], %s818
          %820 = dma.done %s816, 128
        $region68: #{attention_forward.1} parent=59 // pred_fallthru
          _
      $region60: #{attention_forward.1} parent=5 // pred_fallthru
        _
    $region6: #{attention_forward.1} parent=1 // loop_footer
      %s25 = sadd.s32 1, %s21
    $region7: #{attention_forward.1} parent=1 // loop_footer_branch
      %20 = sbr.rel target = $region3
    $region8: #{attention_forward.1} parent=1 // loop_exit
      _
    %821 = vsyncpa [#allocation3], 1
    %s822 = scalar_lea.sflag [#allocation3], 1
    %823 = vsyncpa %s822, 1
    %824 = vsyncpa [#allocation5], 1
    %s825 = scalar_lea.sflag [#allocation5], 1
    %826 = vsyncpa %s825, 1

</llo_original>
